<compile_context>
chip_gen: v7x
topology: tpu7x:2x2x1
jax: 0.10.0
libtpu: 0.0.40
codegen_flags: <defaults>
</compile_context>

<pallas_src>
import jax
import jax.numpy as jnp
from jax.experimental import pallas as pl
from jax.experimental.pallas import tpu as pltpu


def _round_up(x, m):
    return ((x + m - 1) // m) * m


def _cdiv(a, b):
    return (a + b - 1) // b


def bow_classifier(bow_vec, weight, bias, *, tile_b=1024, tile_v=4096):
    """log_softmax(bow_vec @ weight.T + bias, axis=1).

    bow_vec: (B, V) f32, weight: (L, V) f32 (PyTorch nn.Linear layout),
    bias: (L,) f32  ->  (B, L) f32.
    """
    B, V = bow_vec.shape
    L, Vw = weight.shape
    assert V == Vw and bias.shape == (L,)

    if bow_vec.dtype != jnp.float32:
        bow_vec = bow_vec.astype(jnp.float32)
    if weight.dtype != jnp.float32:
        weight = weight.astype(jnp.float32)
    bias2d = bias.reshape(1, L).astype(jnp.float32)

    # Tiles obey the (8, 128) constraint; clamp to the real extents.
    tile_b = min(tile_b, _round_up(B, 8))
    tile_v = min(tile_v, _round_up(V, 128))

    # v7x has 2 TensorCores: make sure the "parallel" batch axis has >= 2
    # tiles whenever the batch is big enough to split.
    if _cdiv(B, tile_b) < 2 and B > 8:
        tile_b = max(8, _round_up(_cdiv(B, 2), 8))

    n_b = _cdiv(B, tile_b)
    n_v = _cdiv(V, tile_v)
    mask_tail = (V % tile_v) != 0  # trace-time flag: mask only if needed.

    def kernel(x_ref, w_ref, b_ref, o_ref, acc_ref):
        # x_ref: (TB, TV) f32   w_ref: (L, TV) f32   b_ref: (1, L) f32
        # o_ref: (TB, L)  f32   acc_ref: (TB, L) f32, resident across V axis.
        k = pl.program_id(1)

        @pl.when(k == 0)
        def _init():
            acc_ref[...] = jnp.zeros_like(acc_ref)

        x = x_ref[...]
        w = w_ref[...]
        if mask_tail:
            # Tail vocab tile: columns >= V are undefined (no HBM pad) — zero
            # both operands so they contribute nothing to the accumulation.
            rem = V - k * tile_v
            xcol = jax.lax.broadcasted_iota(jnp.int32, x.shape, 1)
            wcol = jax.lax.broadcasted_iota(jnp.int32, w.shape, 1)
            x = jnp.where(xcol < rem, x, 0.0)
            w = jnp.where(wcol < rem, w, 0.0)

        # logits_partial = x @ w.T  (contract both last dims), f32 MXU accum.
        acc_ref[...] += jax.lax.dot_general(
            x, w,
            dimension_numbers=(((1,), (1,)), ((), ())),
            preferred_element_type=jnp.float32,
            precision=jax.lax.Precision.HIGHEST,
        )

        @pl.when(k == pl.num_programs(1) - 1)
        def _finalize():
            logits = acc_ref[...] + b_ref[...]
            # Numerically stable log_softmax over the label axis (f32 VPU/EUP,
            # safe on v5e which has no bf16 VPU).
            m = jnp.max(logits, axis=-1, keepdims=True)
            shifted = logits - m
            lse = jnp.log(jnp.sum(jnp.exp(shifted), axis=-1, keepdims=True))
            # NOTE: L < 128 -> masked stores in this epilogue; negligible since
            # output traffic (B*L*4 B) is tiny vs the (B, V) input stream.
            o_ref[...] = (shifted - lse).astype(o_ref.dtype)

    # VMEM footprint with layout padding: x/w/out/bias double-buffered + acc.
    l_lane = _round_up(L, 128)   # lane padding of L-wide last dims
    l_sub = _round_up(L, 8)      # sublane padding of the (L, tile_v) w block
    itm = 4  # f32
    vmem_bytes = (2 * tile_b * tile_v * itm      # x tiles (double-buffered)
                  + 2 * l_sub * tile_v * itm     # w tiles (lane-dense)
                  + 2 * tile_b * l_lane * itm    # out tiles (lane-padded)
                  + 2 * 8 * l_lane * itm         # bias
                  + tile_b * l_lane * itm)       # f32 accumulator
    # Cap at 56 MiB so the request is always valid on v7x's 64 MiB VMEM.
    vmem_limit = int(min(56 * 2**20, max(32 * 2**20, vmem_bytes + (4 << 20))))

    cost = pl.CostEstimate(
        flops=2 * B * V * L,
        transcendentals=2 * B * L,
        # x once, W once per batch tile, bias + output once.
        bytes_accessed=B * V * itm + n_b * V * L * itm + L * itm + B * L * itm,
    )

    out = pl.pallas_call(
        kernel,
        out_shape=jax.ShapeDtypeStruct((B, L), jnp.float32),
        grid_spec=pltpu.PrefetchScalarGridSpec(
            num_scalar_prefetch=0,
            grid=(n_b, n_v),
            in_specs=[
                pl.BlockSpec((tile_b, tile_v), lambda i, k: (i, k)),  # x tile
                pl.BlockSpec((L, tile_v), lambda i, k: (0, k)),       # W tile
                pl.BlockSpec((1, L), lambda i, k: (0, 0)),            # bias
            ],
            out_specs=pl.BlockSpec((tile_b, L), lambda i, k: (i, 0)),
            scratch_shapes=[pltpu.VMEM((tile_b, L), jnp.float32)],
        ),
        compiler_params=pltpu.CompilerParams(
            dimension_semantics=("parallel", "arbitrary"),
            vmem_limit_bytes=vmem_limit,
        ),
        cost_estimate=cost,
    )(bow_vec, weight, bias2d)

    return out


def reference(bow_vec, weight, bias):
    logits = jax.lax.dot_general(
        bow_vec, weight,
        dimension_numbers=(((1,), (1,)), ((), ())),
        preferred_element_type=jnp.float32,
        precision=jax.lax.Precision.HIGHEST,
    ) + bias
    return jax.nn.log_softmax(logits, axis=1)


if __name__ == "__main__":
    # Small shapes implied by the module: batch=8, vocab_size=256, num_labels=8.
    B, VOCAB, LABELS = 8, 256, 8

    key = jax.random.PRNGKey(0)
    kx, kw, kb = jax.random.split(key, 3)

    # Deterministic "nn.Linear"-style init: U(-1/sqrt(V), 1/sqrt(V)).
    bound = 1.0 / jnp.sqrt(jnp.float32(VOCAB))
    # PyTorch weight layout: (num_labels, vocab_size).
    weight = jax.random.uniform(kw, (LABELS, VOCAB), jnp.float32, -bound, bound)
    bias = jax.random.uniform(kb, (LABELS,), jnp.float32, -bound, bound)

    # Synthetic bag-of-words counts.
    bow_vec = jax.random.randint(kx, (B, VOCAB), 0, 5).astype(jnp.float32)

    out = jax.block_until_ready(bow_classifier(bow_vec, weight, bias))
    ref = jax.block_until_ready(reference(bow_vec, weight, bias))

    assert out.shape == (B, LABELS)
    max_err = jnp.max(jnp.abs(out - ref))
    assert jnp.allclose(out, ref, atol=1e-3, rtol=1e-3), f"max err {max_err}"

    print("KERNEL_OK")
</pallas_src>

<mosaic_0001>
module attributes {stable_mosaic.version = 11 : i64} {
  func.func @kernel(%arg0: i32, %arg1: i32, %arg2: memref<8x256xf32, #tpu.memory_space<vmem>>, %arg3: memref<8x256xf32, #tpu.memory_space<vmem>>, %arg4: memref<1x8xf32, #tpu.memory_space<vmem>>, %arg5: memref<8x8xf32, #tpu.memory_space<vmem>>, %arg6: memref<8x8xf32, #tpu.memory_space<vmem>>) attributes {dimension_semantics = [#tpu.dimension_semantics<parallel>, #tpu.dimension_semantics<arbitrary>], iteration_bounds = array<i64: 1, 1>, scalar_prefetch = 0 : i64, scratch_operands = 1 : i64, tpu.core_type = #tpu.core_type<tc>, window_params = [{transform_indices = @transform_0, window_bounds = array<i64: 8, 256>}, {transform_indices = @transform_1, window_bounds = array<i64: 8, 256>}, {pipeline_mode = #tpu.pipeline_mode<synchronous>, transform_indices = @transform_2, window_bounds = array<i64: 1, 8>}, {transform_indices = @transform_3, window_bounds = array<i64: 8, 8>}]} {
    %c0_i32 = arith.constant 0 : i32
    %0 = arith.cmpi eq, %arg1, %c0_i32 : i32
    %1 = arith.extui %0 : i1 to i32
    %c0_i32_0 = arith.constant 0 : i32
    %2 = arith.cmpi ne, %1, %c0_i32_0 : i32
    scf.if %2 {
      %cst_10 = arith.constant 0.000000e+00 : f32
      %12 = vector.broadcast %cst_10 : f32 to vector<8x8xf32>
      %c0_11 = arith.constant 0 : index
      %c0_12 = arith.constant 0 : index
      %13 = vector.load %arg6[%c0_11, %c0_12] : memref<8x8xf32, #tpu.memory_space<vmem>>, vector<8x8xf32>
      tpu.vector_store %arg6[%c0_11, %c0_12], %12 {strides = array<i32>} : memref<8x8xf32, #tpu.memory_space<vmem>>, vector<8x8xf32>,
    } else {
    }
    %c0 = arith.constant 0 : index
    %c0_1 = arith.constant 0 : index
    %3 = vector.load %arg2[%c0, %c0_1] : memref<8x256xf32, #tpu.memory_space<vmem>>, vector<8x256xf32>
    %c0_2 = arith.constant 0 : index
    %c0_3 = arith.constant 0 : index
    %4 = vector.load %arg3[%c0_2, %c0_3] : memref<8x256xf32, #tpu.memory_space<vmem>>, vector<8x256xf32>
    %c0_4 = arith.constant 0 : index
    %c0_5 = arith.constant 0 : index
    %5 = vector.load %arg6[%c0_4, %c0_5] : memref<8x8xf32, #tpu.memory_space<vmem>>, vector<8x8xf32>
    %cst = arith.constant dense<0.000000e+00> : vector<8x8xf32>
    %6 = tpu.matmul %3, %4, %cst {dimension_numbers = #tpu.dot_dimension_numbers<[1], [1], [0], [0], [0, 0, 1, 0], [], []>, precision = #tpu.contract_precision<fp32>} : vector<8x256xf32>, vector<8x256xf32>, vector<8x8xf32> -> vector<8x8xf32>
    %7 = arith.addf %5, %6 : vector<8x8xf32>
    %c0_6 = arith.constant 0 : index
    %c0_7 = arith.constant 0 : index
    %8 = vector.load %arg6[%c0_6, %c0_7] : memref<8x8xf32, #tpu.memory_space<vmem>>, vector<8x8xf32>
    tpu.vector_store %arg6[%c0_6, %c0_7], %7 {strides = array<i32>} : memref<8x8xf32, #tpu.memory_space<vmem>>, vector<8x8xf32>,
    %c0_i32_8 = arith.constant 0 : i32
    %9 = arith.cmpi eq, %arg1, %c0_i32_8 : i32
    %10 = arith.extui %9 : i1 to i32
    %c0_i32_9 = arith.constant 0 : i32
    %11 = arith.cmpi ne, %10, %c0_i32_9 : i32
    scf.if %11 {
      %c0_10 = arith.constant 0 : index
      %c0_11 = arith.constant 0 : index
      %12 = vector.load %arg6[%c0_10, %c0_11] : memref<8x8xf32, #tpu.memory_space<vmem>>, vector<8x8xf32>
      %c0_12 = arith.constant 0 : index
      %c0_13 = arith.constant 0 : index
      %13 = vector.load %arg4[%c0_12, %c0_13] : memref<1x8xf32, #tpu.memory_space<vmem>>, vector<1x8xf32>
      %14 = vector.broadcast %13 : vector<1x8xf32> to vector<8x8xf32>
      %15 = arith.addf %12, %14 : vector<8x8xf32>
      %cst_14 = arith.constant dense<0xFF800000> : vector<8xf32>
      %16 = vector.multi_reduction <maximumf>, %15, %cst_14 [1] : vector<8x8xf32> to vector<8xf32>
      %17 = vector.shape_cast %16 : vector<8xf32> to vector<8x1xf32>
      %18 = vector.broadcast %17 : vector<8x1xf32> to vector<8x8xf32>
      %19 = arith.subf %15, %18 : vector<8x8xf32>
      %20 = math.exp %19 : vector<8x8xf32>
      %cst_15 = arith.constant dense<0.000000e+00> : vector<8xf32>
      %21 = vector.multi_reduction <add>, %20, %cst_15 [1] : vector<8x8xf32> to vector<8xf32>
      %22 = vector.shape_cast %21 : vector<8xf32> to vector<8x1xf32>
      %23 = math.log %22 : vector<8x1xf32>
      %24 = vector.broadcast %23 : vector<8x1xf32> to vector<8x8xf32>
      %25 = arith.subf %19, %24 : vector<8x8xf32>
      %c0_16 = arith.constant 0 : index
      %c0_17 = arith.constant 0 : index
      %26 = vector.load %arg5[%c0_16, %c0_17] : memref<8x8xf32, #tpu.memory_space<vmem>>, vector<8x8xf32>
      tpu.vector_store %arg5[%c0_16, %c0_17], %25 {strides = array<i32>} : memref<8x8xf32, #tpu.memory_space<vmem>>, vector<8x8xf32>,
    } else {
    }
    return
  }
  func.func @transform_0(%arg0: i32, %arg1: i32) -> (i32, i32) {
    %c0_i32 = arith.constant 0 : i32
    return %arg0, %arg1 : i32, i32
  }
  func.func @transform_1(%arg0: i32, %arg1: i32) -> (i32, i32) {
    %c0_i32 = arith.constant 0 : i32
    %c0_i32_0 = arith.constant 0 : i32
    return %c0_i32, %arg1 : i32, i32
  }
  func.func @transform_2(%arg0: i32, %arg1: i32) -> (i32, i32) {
    %c0_i32 = arith.constant 0 : i32
    %c0_i32_0 = arith.constant 0 : i32
    %c0_i32_1 = arith.constant 0 : i32
    return %c0_i32, %c0_i32_0 : i32, i32
  }
  func.func @transform_3(%arg0: i32, %arg1: i32) -> (i32, i32) {
    %c0_i32 = arith.constant 0 : i32
    %c0_i32_0 = arith.constant 0 : i32
    return %arg0, %c0_i32 : i32, i32
  }
}

</mosaic_0001>

<llo_original>
// kernel: tpu_custom_call.1
$region0: #{tpu_custom_call.1}
  #allocation0 [shape = 'u32[]', space=smem, size = 0x4, offset = 0x4, fixed_abs, tag = 'smem constant byte address 0x4 - core index']
  #allocation1 [shape = 'u32[144,128]{1,0:T(1,128)}', space=vmem, size = 0x12000, scoped, tag = 'internal scratch']
  #allocation2 [shape = 'f32[8,8]{1,0:T(8,128)}', space=vmem, size = 0x1000, scoped, tag = 'scratch operand']
  %s0 = inlined_call_operand.hbm [shape: f32[8,256], index: 0, kind: input, shape index: {}]
  %s1 = inlined_call_operand.hbm [shape: f32[8,256], index: 1, kind: input, shape index: {}]
  %s2 = inlined_call_operand.vmem [shape: f32[1,8], index: 2, kind: input, shape index: {}]
  %s3 = inlined_call_operand.hbm [shape: f32[8,8], index: 3, kind: output, shape index: {}]
  %s4 = sld [smem:[#allocation0]]
  $region38: #{tpu_custom_call.1} parent=0
    _
  %s6 = ssub.s32 1, %s4
  %s7 = scalar_select 0, %s6, %s4
  $region1: #{tpu_custom_call.1} parent=0
    #allocation3 [shape = 'u8[8192]{0}', space=vmem, size = 0x2000, scoped, tag = 'input window, operand 0, single buffered']
    #allocation4 [shape = 's32[1]{0}', space=sflag, size = 0x4, scoped, tag = 'scoped memory for tpu_custom_call.1']
    #allocation5 [shape = 's32[1]{0}', space=sflag, size = 0x4, scoped, tag = 'scoped memory for tpu_custom_call.1']
    #allocation6 [shape = 'u8[8192]{0}', space=vmem, size = 0x2000, scoped, tag = 'input window, operand 1, single buffered']
    #allocation7 [shape = 's32[1]{0}', space=sflag, size = 0x4, scoped, tag = 'scoped memory for tpu_custom_call.1']
    #allocation8 [shape = 'u8[4096]{0}', space=vmem, size = 0x1000, scoped, tag = 'output window, operand 0, single buffered']
    %8 = vsyncpa [#allocation4], 0
    %9 = vsyncpa [#allocation7], 0
    %10 = vsyncpa [#allocation5], 0
    // Predicated region
    $region2: #{tpu_custom_call.1} parent=1 // pred_check
      _
    $region3: #{tpu_custom_call.1} parent=1 // pred_check_branch
      %12 = sbr.rel (0) target = $region5
    $region4: #{tpu_custom_call.1} parent=1 // pred_region
      %s14 = ssub.s32 256, 256
      %15 = vsyncadd [#allocation4], %s14
      %s17 = sshll.u32 [#allocation3], 4
      %s18 = int_to_ptr.vmem [resolvable:$true] %s17
      %20 = dma.hbm_to_vmem [thread:$0]  %s0, 256, %s18, [#allocation4]
    $region5: #{tpu_custom_call.1} parent=1 // pred_fallthru
      _
    // Predicated region
    $region6: #{tpu_custom_call.1} parent=1 // pred_check
      _
    $region7: #{tpu_custom_call.1} parent=1 // pred_check_branch
      %22 = sbr.rel (0) target = $region9
    $region8: #{tpu_custom_call.1} parent=1 // pred_region
      %s24 = ssub.s32 256, 256
      %25 = vsyncadd [#allocation7], %s24
      %s27 = sshll.u32 [#allocation6], 4
      %s28 = int_to_ptr.vmem [resolvable:$true] %s27
      %30 = dma.hbm_to_vmem [thread:$0]  %s1, 256, %s28, [#allocation7]
    $region9: #{tpu_custom_call.1} parent=1 // pred_fallthru
      _
    // Predicated region
    $region10: #{tpu_custom_call.1} parent=1 // pred_check
      _
    $region11: #{tpu_custom_call.1} parent=1 // pred_check_branch
      %32 = sbr.rel (0) target = $region13
    $region12: #{tpu_custom_call.1} parent=1 // pred_region
      _
    $region13: #{tpu_custom_call.1} parent=1 // pred_fallthru
      _
    // Predicated region
    $region14: #{tpu_custom_call.1} parent=1 // pred_check
      _
    $region15: #{tpu_custom_call.1} parent=1 // pred_check_branch
      %34 = sbr.rel (0) target = $region17
    $region16: #{tpu_custom_call.1} parent=1 // pred_region
      %35 = dma.done [#allocation4], 256
    $region17: #{tpu_custom_call.1} parent=1 // pred_fallthru
      _
    // Predicated region
    $region18: #{tpu_custom_call.1} parent=1 // pred_check
      _
    $region19: #{tpu_custom_call.1} parent=1 // pred_check_branch
      %37 = sbr.rel (0) target = $region21
    $region20: #{tpu_custom_call.1} parent=1 // pred_region
      %38 = dma.done [#allocation7], 256
    $region21: #{tpu_custom_call.1} parent=1 // pred_fallthru
      _
    %p39 = scmp.eq.s32.totalorder 0, 0
    // Predicated region
    $region22: #{tpu_custom_call.1} parent=1 // pred_check
      %p40 = pneg %p39
    $region23: #{tpu_custom_call.1} parent=1 // pred_check_branch
      %42 = sbr.rel (%p40) target = $region25
    $region24: #{tpu_custom_call.1} parent=1 // pred_region
      %vm43 = vcmask 64512
      %44 = vst.msk [vmem:[#allocation2] sm:$0xff] %vm43, 0.0
    $region25: #{tpu_custom_call.1} parent=1 // pred_fallthru
      _
    %v45 = vld [vmem:[#allocation3] sm:$0xff]
    %v46 = vld [vmem:[#allocation3 + $0x8] sm:$0xff]
    %v47 = vld [vmem:[#allocation6] sm:$0xff]
    %v48 = vld [vmem:[#allocation6 + $0x8] sm:$0xff]
    %v49 = vld [vmem:[#allocation2] sm:$0xff]
    %v50 = vand.u32 %v48, 4294901760
    %51 = vmatprep.subr.mxu0 %v50
    %v52 = vand.u32 %v47, 4294901760
    %53 = vmatpush1.xpose.msra.mxu0 %v52
    %54 = vmatprep.subr.mxu0 0.0
    %55 = vmatpush1.xpose.msra.mxu0 0.0
    %56 = vmatprep.subr.mxu0 0.0
    %57 = vmatpush1.xpose.msra.mxu0 0.0
    %58 = vmatprep.subr.mxu0 0.0
    %59 = vmatpush1.xpose.msra.mxu0 0.0
    %60 = vmatprep.subr.mxu0 0.0
    %61 = vmatpush1.xpose.msra.mxu0 0.0
    %62 = vmatprep.subr.mxu0 0.0
    %63 = vmatpush1.xpose.msra.mxu0 0.0
    %64 = vmatprep.subr.mxu0 0.0
    %65 = vmatpush1.xpose.msra.mxu0 0.0
    %66 = vmatprep.subr.mxu0 0.0
    %67 = vmatpush1.xpose.msra.mxu0 0.0
    %68 = vmatprep.subr.mxu0 0.0
    %69 = vmatpush1.xpose.msra.mxu0 0.0
    %70 = vmatprep.subr.mxu0 0.0
    %71 = vmatpush1.xpose.msra.mxu0 0.0
    %72 = vmatprep.subr.mxu0 0.0
    %73 = vmatpush1.xpose.msra.mxu0 0.0
    %74 = vmatprep.subr.mxu0 0.0
    %75 = vmatpush1.xpose.msra.mxu0 0.0
    %76 = vmatprep.subr.mxu0 0.0
    %77 = vmatpush1.xpose.msra.mxu0 0.0
    %78 = vmatprep.subr.mxu0 0.0
    %79 = vmatpush1.xpose.msra.mxu0 0.0
    %80 = vmatprep.subr.mxu0 0.0
    %81 = vmatpush1.xpose.msra.mxu0 0.0
    %82 = vmatprep.subr.mxu0 0.0
    %83 = vmatpush1.xpose.msra.mxu0 0.0
    %84 = vmatprep.subr.mxu0 0.0
    %85 = vmatpush1.xpose.msra.mxu0 0.0
    %86 = vmatprep.subr.mxu0 0.0
    %87 = vmatpush1.xpose.msra.mxu0 0.0
    %88 = vmatprep.subr.mxu0 0.0
    %89 = vmatpush1.xpose.msra.mxu0 0.0
    %90 = vmatprep.subr.mxu0 0.0
    %91 = vmatpush1.xpose.msra.mxu0 0.0
    %92 = vmatprep.subr.mxu0 0.0
    %93 = vmatpush1.xpose.msra.mxu0 0.0
    %94 = vmatprep.subr.mxu0 0.0
    %95 = vmatpush1.xpose.msra.mxu0 0.0
    %96 = vmatprep.subr.mxu0 0.0
    %97 = vmatpush1.xpose.msra.mxu0 0.0
    %98 = vmatprep.subr.mxu0 0.0
    %99 = vmatpush1.xpose.msra.mxu0 0.0
    %100 = vmatprep.subr.mxu0 0.0
    %101 = vmatpush1.xpose.msra.mxu0 0.0
    %102 = vmatprep.subr.mxu0 0.0
    %103 = vmatpush1.xpose.msra.mxu0 0.0
    %104 = vmatprep.subr.mxu0 0.0
    %105 = vmatpush1.xpose.msra.mxu0 0.0
    %106 = vmatprep.subr.mxu0 0.0
    %107 = vmatpush1.xpose.msra.mxu0 0.0
    %108 = vmatprep.subr.mxu0 0.0
    %109 = vmatpush1.xpose.msra.mxu0 0.0
    %110 = vmatprep.subr.mxu0 0.0
    %111 = vmatpush1.xpose.msra.mxu0 0.0
    %112 = vmatprep.subr.mxu0 0.0
    %113 = vmatpush1.xpose.msra.mxu0 0.0
    %114 = vmatprep.subr.mxu0 0.0
    %115 = vmatpush1.xpose.msra.mxu0 0.0
    %v116 = vand.u32 %v46, 4294901760
    %v117 = vsub.f32 %v46, %v116
    %v118 = vand.u32 %v117, 4294901760
    %v119 = vsub.f32 %v117, %v118
    %v120 = vand.u32 %v119, 4294901760
    %121 = vmatprep.mubr.f32.mxu0 %v120
    %v122 = vand.u32 %v45, 4294901760
    %v123 = vsub.f32 %v45, %v122
    %v124 = vand.u32 %v123, 4294901760
    %v125 = vsub.f32 %v123, %v124
    %v126 = vand.u32 %v125, 4294901760
    %127 = vmatmul.mubr.f32.gmra.mrb[0].mxu0 %v126
    %v128 = vpop.f32.mrb[0].mxu0
    %v129 = vadd.f32 0.0, %v128
    %v130 = vpop.f32.mrb[0].mxu0
    %131 = vdwg.mxu0
    %v132 = vand.u32 %v48, 4294901760
    %v133 = vsub.f32 %v48, %v132
    %v134 = vand.u32 %v133, 4294901760
    %v135 = vsub.f32 %v133, %v134
    %v136 = vand.u32 %v135, 4294901760
    %137 = vmatprep.subr.mxu0 %v136
    %v138 = vand.u32 %v47, 4294901760
    %v139 = vsub.f32 %v47, %v138
    %v140 = vand.u32 %v139, 4294901760
    %v141 = vsub.f32 %v139, %v140
    %v142 = vand.u32 %v141, 4294901760
    %143 = vmatpush1.xpose.msra.mxu0 %v142
    %144 = vmatprep.subr.mxu0 0.0
    %145 = vmatpush1.xpose.msra.mxu0 0.0
    %146 = vmatprep.subr.mxu0 0.0
    %147 = vmatpush1.xpose.msra.mxu0 0.0
    %148 = vmatprep.subr.mxu0 0.0
    %149 = vmatpush1.xpose.msra.mxu0 0.0
    %150 = vmatprep.subr.mxu0 0.0
    %151 = vmatpush1.xpose.msra.mxu0 0.0
    %152 = vmatprep.subr.mxu0 0.0
    %153 = vmatpush1.xpose.msra.mxu0 0.0
    %154 = vmatprep.subr.mxu0 0.0
    %155 = vmatpush1.xpose.msra.mxu0 0.0
    %156 = vmatprep.subr.mxu0 0.0
    %157 = vmatpush1.xpose.msra.mxu0 0.0
    %158 = vmatprep.subr.mxu0 0.0
    %159 = vmatpush1.xpose.msra.mxu0 0.0
    %160 = vmatprep.subr.mxu0 0.0
    %161 = vmatpush1.xpose.msra.mxu0 0.0
    %162 = vmatprep.subr.mxu0 0.0
    %163 = vmatpush1.xpose.msra.mxu0 0.0
    %164 = vmatprep.subr.mxu0 0.0
    %165 = vmatpush1.xpose.msra.mxu0 0.0
    %166 = vmatprep.subr.mxu0 0.0
    %167 = vmatpush1.xpose.msra.mxu0 0.0
    %168 = vmatprep.subr.mxu0 0.0
    %169 = vmatpush1.xpose.msra.mxu0 0.0
    %170 = vmatprep.subr.mxu0 0.0
    %171 = vmatpush1.xpose.msra.mxu0 0.0
    %172 = vmatprep.subr.mxu0 0.0
    %173 = vmatpush1.xpose.msra.mxu0 0.0
    %174 = vmatprep.subr.mxu0 0.0
    %175 = vmatpush1.xpose.msra.mxu0 0.0
    %176 = vmatprep.subr.mxu0 0.0
    %177 = vmatpush1.xpose.msra.mxu0 0.0
    %178 = vmatprep.subr.mxu0 0.0
    %179 = vmatpush1.xpose.msra.mxu0 0.0
    %180 = vmatprep.subr.mxu0 0.0
    %181 = vmatpush1.xpose.msra.mxu0 0.0
    %182 = vmatprep.subr.mxu0 0.0
    %183 = vmatpush1.xpose.msra.mxu0 0.0
    %184 = vmatprep.subr.mxu0 0.0
    %185 = vmatpush1.xpose.msra.mxu0 0.0
    %186 = vmatprep.subr.mxu0 0.0
    %187 = vmatpush1.xpose.msra.mxu0 0.0
    %188 = vmatprep.subr.mxu0 0.0
    %189 = vmatpush1.xpose.msra.mxu0 0.0
    %190 = vmatprep.subr.mxu0 0.0
    %191 = vmatpush1.xpose.msra.mxu0 0.0
    %192 = vmatprep.subr.mxu0 0.0
    %193 = vmatpush1.xpose.msra.mxu0 0.0
    %194 = vmatprep.subr.mxu0 0.0
    %195 = vmatpush1.xpose.msra.mxu0 0.0
    %196 = vmatprep.subr.mxu0 0.0
    %197 = vmatpush1.xpose.msra.mxu0 0.0
    %198 = vmatprep.subr.mxu0 0.0
    %199 = vmatpush1.xpose.msra.mxu0 0.0
    %200 = vmatprep.subr.mxu0 0.0
    %201 = vmatpush1.xpose.msra.mxu0 0.0
    %202 = vmatprep.subr.mxu0 0.0
    %203 = vmatpush1.xpose.msra.mxu0 0.0
    %204 = vmatprep.subr.mxu0 0.0
    %205 = vmatpush1.xpose.msra.mxu0 0.0
    %v206 = vand.u32 %v46, 4294901760
    %207 = vmatprep.mubr.f32.mxu0 %v206
    %v208 = vand.u32 %v45, 4294901760
    %209 = vmatmul.mubr.f32.gmra.mrb[0].mxu0 %v208
    %v210 = vpop.f32.mrb[0].mxu0
    %v211 = vadd.f32 %v129, %v210
    %v212 = vpop.f32.mrb[0].mxu0
    %213 = vdwg.mxu0
    %v214 = vand.u32 %v48, 4294901760
    %v215 = vsub.f32 %v48, %v214
    %216 = vmatprep.subr.mxu0 %v215
    %v217 = vand.u32 %v47, 4294901760
    %v218 = vsub.f32 %v47, %v217
    %219 = vmatpush1.xpose.msra.mxu0 %v218
    %220 = vmatprep.subr.mxu0 0.0
    %221 = vmatpush1.xpose.msra.mxu0 0.0
    %222 = vmatprep.subr.mxu0 0.0
    %223 = vmatpush1.xpose.msra.mxu0 0.0
    %224 = vmatprep.subr.mxu0 0.0
    %225 = vmatpush1.xpose.msra.mxu0 0.0
    %226 = vmatprep.subr.mxu0 0.0
    %227 = vmatpush1.xpose.msra.mxu0 0.0
    %228 = vmatprep.subr.mxu0 0.0
    %229 = vmatpush1.xpose.msra.mxu0 0.0
    %230 = vmatprep.subr.mxu0 0.0
    %231 = vmatpush1.xpose.msra.mxu0 0.0
    %232 = vmatprep.subr.mxu0 0.0
    %233 = vmatpush1.xpose.msra.mxu0 0.0
    %234 = vmatprep.subr.mxu0 0.0
    %235 = vmatpush1.xpose.msra.mxu0 0.0
    %236 = vmatprep.subr.mxu0 0.0
    %237 = vmatpush1.xpose.msra.mxu0 0.0
    %238 = vmatprep.subr.mxu0 0.0
    %239 = vmatpush1.xpose.msra.mxu0 0.0
    %240 = vmatprep.subr.mxu0 0.0
    %241 = vmatpush1.xpose.msra.mxu0 0.0
    %242 = vmatprep.subr.mxu0 0.0
    %243 = vmatpush1.xpose.msra.mxu0 0.0
    %244 = vmatprep.subr.mxu0 0.0
    %245 = vmatpush1.xpose.msra.mxu0 0.0
    %246 = vmatprep.subr.mxu0 0.0
    %247 = vmatpush1.xpose.msra.mxu0 0.0
    %248 = vmatprep.subr.mxu0 0.0
    %249 = vmatpush1.xpose.msra.mxu0 0.0
    %250 = vmatprep.subr.mxu0 0.0
    %251 = vmatpush1.xpose.msra.mxu0 0.0
    %252 = vmatprep.subr.mxu0 0.0
    %253 = vmatpush1.xpose.msra.mxu0 0.0
    %254 = vmatprep.subr.mxu0 0.0
    %255 = vmatpush1.xpose.msra.mxu0 0.0
    %256 = vmatprep.subr.mxu0 0.0
    %257 = vmatpush1.xpose.msra.mxu0 0.0
    %258 = vmatprep.subr.mxu0 0.0
    %259 = vmatpush1.xpose.msra.mxu0 0.0
    %260 = vmatprep.subr.mxu0 0.0
    %261 = vmatpush1.xpose.msra.mxu0 0.0
    %262 = vmatprep.subr.mxu0 0.0
    %263 = vmatpush1.xpose.msra.mxu0 0.0
    %264 = vmatprep.subr.mxu0 0.0
    %265 = vmatpush1.xpose.msra.mxu0 0.0
    %266 = vmatprep.subr.mxu0 0.0
    %267 = vmatpush1.xpose.msra.mxu0 0.0
    %268 = vmatprep.subr.mxu0 0.0
    %269 = vmatpush1.xpose.msra.mxu0 0.0
    %270 = vmatprep.subr.mxu0 0.0
    %271 = vmatpush1.xpose.msra.mxu0 0.0
    %272 = vmatprep.subr.mxu0 0.0
    %273 = vmatpush1.xpose.msra.mxu0 0.0
    %274 = vmatprep.subr.mxu0 0.0
    %275 = vmatpush1.xpose.msra.mxu0 0.0
    %276 = vmatprep.subr.mxu0 0.0
    %277 = vmatpush1.xpose.msra.mxu0 0.0
    %278 = vmatprep.subr.mxu0 0.0
    %279 = vmatpush1.xpose.msra.mxu0 0.0
    %280 = vmatprep.subr.mxu0 0.0
    %281 = vmatpush1.xpose.msra.mxu0 0.0
    %v282 = vand.u32 %v46, 4294901760
    %v283 = vsub.f32 %v46, %v282
    %284 = vmatprep.mubr.f32.mxu0 %v283
    %v285 = vand.u32 %v45, 4294901760
    %v286 = vsub.f32 %v45, %v285
    %287 = vmatmul.mubr.f32.gmra.mrb[0].mxu0 %v286
    %v288 = vpop.f32.mrb[0].mxu0
    %v289 = vadd.f32 %v211, %v288
    %v290 = vpop.f32.mrb[0].mxu0
    %291 = vdwg.mxu0
    %v292 = vand.u32 %v48, 4294901760
    %293 = vmatprep.subr.mxu0 %v292
    %v294 = vand.u32 %v47, 4294901760
    %295 = vmatpush1.xpose.msra.mxu0 %v294
    %296 = vmatprep.subr.mxu0 0.0
    %297 = vmatpush1.xpose.msra.mxu0 0.0
    %298 = vmatprep.subr.mxu0 0.0
    %299 = vmatpush1.xpose.msra.mxu0 0.0
    %300 = vmatprep.subr.mxu0 0.0
    %301 = vmatpush1.xpose.msra.mxu0 0.0
    %302 = vmatprep.subr.mxu0 0.0
    %303 = vmatpush1.xpose.msra.mxu0 0.0
    %304 = vmatprep.subr.mxu0 0.0
    %305 = vmatpush1.xpose.msra.mxu0 0.0
    %306 = vmatprep.subr.mxu0 0.0
    %307 = vmatpush1.xpose.msra.mxu0 0.0
    %308 = vmatprep.subr.mxu0 0.0
    %309 = vmatpush1.xpose.msra.mxu0 0.0
    %310 = vmatprep.subr.mxu0 0.0
    %311 = vmatpush1.xpose.msra.mxu0 0.0
    %312 = vmatprep.subr.mxu0 0.0
    %313 = vmatpush1.xpose.msra.mxu0 0.0
    %314 = vmatprep.subr.mxu0 0.0
    %315 = vmatpush1.xpose.msra.mxu0 0.0
    %316 = vmatprep.subr.mxu0 0.0
    %317 = vmatpush1.xpose.msra.mxu0 0.0
    %318 = vmatprep.subr.mxu0 0.0
    %319 = vmatpush1.xpose.msra.mxu0 0.0
    %320 = vmatprep.subr.mxu0 0.0
    %321 = vmatpush1.xpose.msra.mxu0 0.0
    %322 = vmatprep.subr.mxu0 0.0
    %323 = vmatpush1.xpose.msra.mxu0 0.0
    %324 = vmatprep.subr.mxu0 0.0
    %325 = vmatpush1.xpose.msra.mxu0 0.0
    %326 = vmatprep.subr.mxu0 0.0
    %327 = vmatpush1.xpose.msra.mxu0 0.0
    %328 = vmatprep.subr.mxu0 0.0
    %329 = vmatpush1.xpose.msra.mxu0 0.0
    %330 = vmatprep.subr.mxu0 0.0
    %331 = vmatpush1.xpose.msra.mxu0 0.0
    %332 = vmatprep.subr.mxu0 0.0
    %333 = vmatpush1.xpose.msra.mxu0 0.0
    %334 = vmatprep.subr.mxu0 0.0
    %335 = vmatpush1.xpose.msra.mxu0 0.0
    %336 = vmatprep.subr.mxu0 0.0
    %337 = vmatpush1.xpose.msra.mxu0 0.0
    %338 = vmatprep.subr.mxu0 0.0
    %339 = vmatpush1.xpose.msra.mxu0 0.0
    %340 = vmatprep.subr.mxu0 0.0
    %341 = vmatpush1.xpose.msra.mxu0 0.0
    %342 = vmatprep.subr.mxu0 0.0
    %343 = vmatpush1.xpose.msra.mxu0 0.0
    %344 = vmatprep.subr.mxu0 0.0
    %345 = vmatpush1.xpose.msra.mxu0 0.0
    %346 = vmatprep.subr.mxu0 0.0
    %347 = vmatpush1.xpose.msra.mxu0 0.0
    %348 = vmatprep.subr.mxu0 0.0
    %349 = vmatpush1.xpose.msra.mxu0 0.0
    %350 = vmatprep.subr.mxu0 0.0
    %351 = vmatpush1.xpose.msra.mxu0 0.0
    %352 = vmatprep.subr.mxu0 0.0
    %353 = vmatpush1.xpose.msra.mxu0 0.0
    %354 = vmatprep.subr.mxu0 0.0
    %355 = vmatpush1.xpose.msra.mxu0 0.0
    %356 = vmatprep.subr.mxu0 0.0
    %357 = vmatpush1.xpose.msra.mxu0 0.0
    %v358 = vand.u32 %v46, 4294901760
    %v359 = vsub.f32 %v46, %v358
    %v360 = vand.u32 %v359, 4294901760
    %361 = vmatprep.mubr.f32.mxu0 %v360
    %v362 = vand.u32 %v45, 4294901760
    %v363 = vsub.f32 %v45, %v362
    %v364 = vand.u32 %v363, 4294901760
    %365 = vmatmul.mubr.f32.gmra.mrb[0].mxu0 %v364
    %v366 = vpop.f32.mrb[0].mxu0
    %v367 = vadd.f32 %v289, %v366
    %v368 = vpop.f32.mrb[0].mxu0
    %369 = vdwg.mxu0
    %v370 = vand.u32 %v48, 4294901760
    %v371 = vsub.f32 %v48, %v370
    %v372 = vand.u32 %v371, 4294901760
    %373 = vmatprep.subr.mxu0 %v372
    %v374 = vand.u32 %v47, 4294901760
    %v375 = vsub.f32 %v47, %v374
    %v376 = vand.u32 %v375, 4294901760
    %377 = vmatpush1.xpose.msra.mxu0 %v376
    %378 = vmatprep.subr.mxu0 0.0
    %379 = vmatpush1.xpose.msra.mxu0 0.0
    %380 = vmatprep.subr.mxu0 0.0
    %381 = vmatpush1.xpose.msra.mxu0 0.0
    %382 = vmatprep.subr.mxu0 0.0
    %383 = vmatpush1.xpose.msra.mxu0 0.0
    %384 = vmatprep.subr.mxu0 0.0
    %385 = vmatpush1.xpose.msra.mxu0 0.0
    %386 = vmatprep.subr.mxu0 0.0
    %387 = vmatpush1.xpose.msra.mxu0 0.0
    %388 = vmatprep.subr.mxu0 0.0
    %389 = vmatpush1.xpose.msra.mxu0 0.0
    %390 = vmatprep.subr.mxu0 0.0
    %391 = vmatpush1.xpose.msra.mxu0 0.0
    %392 = vmatprep.subr.mxu0 0.0
    %393 = vmatpush1.xpose.msra.mxu0 0.0
    %394 = vmatprep.subr.mxu0 0.0
    %395 = vmatpush1.xpose.msra.mxu0 0.0
    %396 = vmatprep.subr.mxu0 0.0
    %397 = vmatpush1.xpose.msra.mxu0 0.0
    %398 = vmatprep.subr.mxu0 0.0
    %399 = vmatpush1.xpose.msra.mxu0 0.0
    %400 = vmatprep.subr.mxu0 0.0
    %401 = vmatpush1.xpose.msra.mxu0 0.0
    %402 = vmatprep.subr.mxu0 0.0
    %403 = vmatpush1.xpose.msra.mxu0 0.0
    %404 = vmatprep.subr.mxu0 0.0
    %405 = vmatpush1.xpose.msra.mxu0 0.0
    %406 = vmatprep.subr.mxu0 0.0
    %407 = vmatpush1.xpose.msra.mxu0 0.0
    %408 = vmatprep.subr.mxu0 0.0
    %409 = vmatpush1.xpose.msra.mxu0 0.0
    %410 = vmatprep.subr.mxu0 0.0
    %411 = vmatpush1.xpose.msra.mxu0 0.0
    %412 = vmatprep.subr.mxu0 0.0
    %413 = vmatpush1.xpose.msra.mxu0 0.0
    %414 = vmatprep.subr.mxu0 0.0
    %415 = vmatpush1.xpose.msra.mxu0 0.0
    %416 = vmatprep.subr.mxu0 0.0
    %417 = vmatpush1.xpose.msra.mxu0 0.0
    %418 = vmatprep.subr.mxu0 0.0
    %419 = vmatpush1.xpose.msra.mxu0 0.0
    %420 = vmatprep.subr.mxu0 0.0
    %421 = vmatpush1.xpose.msra.mxu0 0.0
    %422 = vmatprep.subr.mxu0 0.0
    %423 = vmatpush1.xpose.msra.mxu0 0.0
    %424 = vmatprep.subr.mxu0 0.0
    %425 = vmatpush1.xpose.msra.mxu0 0.0
    %426 = vmatprep.subr.mxu0 0.0
    %427 = vmatpush1.xpose.msra.mxu0 0.0
    %428 = vmatprep.subr.mxu0 0.0
    %429 = vmatpush1.xpose.msra.mxu0 0.0
    %430 = vmatprep.subr.mxu0 0.0
    %431 = vmatpush1.xpose.msra.mxu0 0.0
    %432 = vmatprep.subr.mxu0 0.0
    %433 = vmatpush1.xpose.msra.mxu0 0.0
    %434 = vmatprep.subr.mxu0 0.0
    %435 = vmatpush1.xpose.msra.mxu0 0.0
    %436 = vmatprep.subr.mxu0 0.0
    %437 = vmatpush1.xpose.msra.mxu0 0.0
    %438 = vmatprep.subr.mxu0 0.0
    %439 = vmatpush1.xpose.msra.mxu0 0.0
    %v440 = vand.u32 %v46, 4294901760
    %441 = vmatprep.mubr.f32.mxu0 %v440
    %v442 = vand.u32 %v45, 4294901760
    %443 = vmatmul.mubr.f32.gmra.mrb[0].mxu0 %v442
    %v444 = vpop.f32.mrb[0].mxu0
    %v445 = vadd.f32 %v367, %v444
    %v446 = vpop.f32.mrb[0].mxu0
    %447 = vdwg.mxu0
    %v448 = vand.u32 %v48, 4294901760
    %449 = vmatprep.subr.mxu0 %v448
    %v450 = vand.u32 %v47, 4294901760
    %451 = vmatpush1.xpose.msra.mxu0 %v450
    %452 = vmatprep.subr.mxu0 0.0
    %453 = vmatpush1.xpose.msra.mxu0 0.0
    %454 = vmatprep.subr.mxu0 0.0
    %455 = vmatpush1.xpose.msra.mxu0 0.0
    %456 = vmatprep.subr.mxu0 0.0
    %457 = vmatpush1.xpose.msra.mxu0 0.0
    %458 = vmatprep.subr.mxu0 0.0
    %459 = vmatpush1.xpose.msra.mxu0 0.0
    %460 = vmatprep.subr.mxu0 0.0
    %461 = vmatpush1.xpose.msra.mxu0 0.0
    %462 = vmatprep.subr.mxu0 0.0
    %463 = vmatpush1.xpose.msra.mxu0 0.0
    %464 = vmatprep.subr.mxu0 0.0
    %465 = vmatpush1.xpose.msra.mxu0 0.0
    %466 = vmatprep.subr.mxu0 0.0
    %467 = vmatpush1.xpose.msra.mxu0 0.0
    %468 = vmatprep.subr.mxu0 0.0
    %469 = vmatpush1.xpose.msra.mxu0 0.0
    %470 = vmatprep.subr.mxu0 0.0
    %471 = vmatpush1.xpose.msra.mxu0 0.0
    %472 = vmatprep.subr.mxu0 0.0
    %473 = vmatpush1.xpose.msra.mxu0 0.0
    %474 = vmatprep.subr.mxu0 0.0
    %475 = vmatpush1.xpose.msra.mxu0 0.0
    %476 = vmatprep.subr.mxu0 0.0
    %477 = vmatpush1.xpose.msra.mxu0 0.0
    %478 = vmatprep.subr.mxu0 0.0
    %479 = vmatpush1.xpose.msra.mxu0 0.0
    %480 = vmatprep.subr.mxu0 0.0
    %481 = vmatpush1.xpose.msra.mxu0 0.0
    %482 = vmatprep.subr.mxu0 0.0
    %483 = vmatpush1.xpose.msra.mxu0 0.0
    %484 = vmatprep.subr.mxu0 0.0
    %485 = vmatpush1.xpose.msra.mxu0 0.0
    %486 = vmatprep.subr.mxu0 0.0
    %487 = vmatpush1.xpose.msra.mxu0 0.0
    %488 = vmatprep.subr.mxu0 0.0
    %489 = vmatpush1.xpose.msra.mxu0 0.0
    %490 = vmatprep.subr.mxu0 0.0
    %491 = vmatpush1.xpose.msra.mxu0 0.0
    %492 = vmatprep.subr.mxu0 0.0
    %493 = vmatpush1.xpose.msra.mxu0 0.0
    %494 = vmatprep.subr.mxu0 0.0
    %495 = vmatpush1.xpose.msra.mxu0 0.0
    %496 = vmatprep.subr.mxu0 0.0
    %497 = vmatpush1.xpose.msra.mxu0 0.0
    %498 = vmatprep.subr.mxu0 0.0
    %499 = vmatpush1.xpose.msra.mxu0 0.0
    %500 = vmatprep.subr.mxu0 0.0
    %501 = vmatpush1.xpose.msra.mxu0 0.0
    %502 = vmatprep.subr.mxu0 0.0
    %503 = vmatpush1.xpose.msra.mxu0 0.0
    %504 = vmatprep.subr.mxu0 0.0
    %505 = vmatpush1.xpose.msra.mxu0 0.0
    %506 = vmatprep.subr.mxu0 0.0
    %507 = vmatpush1.xpose.msra.mxu0 0.0
    %508 = vmatprep.subr.mxu0 0.0
    %509 = vmatpush1.xpose.msra.mxu0 0.0
    %510 = vmatprep.subr.mxu0 0.0
    %511 = vmatpush1.xpose.msra.mxu0 0.0
    %512 = vmatprep.subr.mxu0 0.0
    %513 = vmatpush1.xpose.msra.mxu0 0.0
    %v514 = vand.u32 %v46, 4294901760
    %515 = vmatprep.mubr.f32.mxu0 %v514
    %v516 = vand.u32 %v45, 4294901760
    %517 = vmatmul.mubr.f32.gmra.mrb[0].mxu0 %v516
    %v518 = vpop.f32.mrb[0].mxu0
    %v519 = vadd.f32 %v445, %v518
    %v520 = vpop.f32.mrb[0].mxu0
    %521 = vdwg.mxu0
    %v522 = vadd.f32 %v49, %v519
    %vm523 = vcmask 64512
    %524 = vst.msk [vmem:[#allocation2] sm:$0xff] %vm523, %v522
    // Predicated region
    $region26: #{tpu_custom_call.1} parent=1 // pred_check
      %p525 = pneg %p39
    $region27: #{tpu_custom_call.1} parent=1 // pred_check_branch
      %527 = sbr.rel (%p525) target = $region29
    $region28: #{tpu_custom_call.1} parent=1 // pred_region
      %v528 = vld [vmem:[#allocation2] sm:$0xff]
      %v529 = vld [vmem:[%s2] sm:$0x1]
      %v531 = vlaneseq
      %v532 = vshrl.u32 %v531, 7
      %v533 = vsub.s32 0, %v532
      %v534 = vrot.slane %v529, %v533
      %v536 = vadd.f32 %v528, %v534
      %v537 = vsel %vm523, %v536, -inf
      %538 = vmax.xlane.f32.xlu0 %v537
      %v539 = vpop.xlane.xlu0 %538
      %v540 = vsub.f32 %v536, %v539
      %v541 = vmul.f32 %v540, 1.442695
      %v542 = vpow.pop %v541
      %v543 = vsel %vm523, %v542, 0.0
      %544 = vadd.xlane.f32.xlu0 %v543
      %v545 = vpop.xlane.xlu0 %544
      %v546 = vlog2.pop %v545
      %v547 = vmul.f32 %v546, 0.6931472
      %v548 = vsub.f32 %v540, %v547
      %549 = vst.msk [vmem:[#allocation8] sm:$0xff] %vm523, %v548
    $region29: #{tpu_custom_call.1} parent=1 // pred_fallthru
      _
    // Predicated region
    $region30: #{tpu_custom_call.1} parent=1 // pred_check
      _
    $region31: #{tpu_custom_call.1} parent=1 // pred_check_branch
      %551 = sbr.rel (0) target = $region33
    $region32: #{tpu_custom_call.1} parent=1 // pred_region
      %s553 = ssub.s32 128, 128
      %554 = vsyncadd [#allocation5], %s553
      %s556 = sshll.u32 [#allocation8], 4
      %s557 = int_to_ptr.vmem [resolvable:$true] %s556
      %559 = dma.vmem_to_hbm [thread:$0]  %s557, 128, %s3, [#allocation5]
    $region33: #{tpu_custom_call.1} parent=1 // pred_fallthru
      _
    // Predicated region
    $region34: #{tpu_custom_call.1} parent=1 // pred_check
      _
    $region35: #{tpu_custom_call.1} parent=1 // pred_check_branch
      %561 = sbr.rel (0) target = $region37
    $region36: #{tpu_custom_call.1} parent=1 // pred_region
      %562 = dma.done [#allocation5], 128
    $region37: #{tpu_custom_call.1} parent=1 // pred_fallthru
      _
    %563 = vsyncpa [#allocation4], 1
    %564 = vsyncpa [#allocation7], 1
    %565 = vsyncpa [#allocation5], 1

</llo_original>
